<compile_context>
chip_gen: v5e
topology: v5e:2x2
jax: 0.10.0
libtpu: 0.0.40
codegen_flags: <defaults>
</compile_context>

<pallas_src>
import jax
import jax.numpy as jnp
from jax.experimental import pallas as pl
from jax.experimental.pallas import tpu as pltpu


def _round_up(x, m):
    return (x + m - 1) // m * m


def _fusion_kernel(x1_ref, x2_ref, w1_ref, w2_ref, b_ref, o_ref):
    # x1_ref: (C1, T), x2_ref: (C2, T)   -- channels on sublanes, HW on lanes
    # w1_ref: (Cout, C1), w2_ref: (Cout, C2), b_ref: (Cout, 1)
    acc = jnp.dot(w1_ref[...], x1_ref[...], preferred_element_type=jnp.float32)
    acc = acc + jnp.dot(w2_ref[...], x2_ref[...],
                        preferred_element_type=jnp.float32)
    o_ref[...] = (acc + b_ref[...].astype(jnp.float32)).astype(o_ref.dtype)


def feature_fusion(x1, x2, weight, bias, *, tile_hw=2048, compute_dtype=None):
    """x1: (N, C1, H, W), x2: (N, C2, H, W)  [NCHW, matching PyTorch]
    weight: (Cout, C1 + C2)  (1x1 conv kernel squeezed), bias: (Cout,)
    returns: (N, Cout, H, W) in x1.dtype
    """
    n, c1, h, w = x1.shape
    n2, c2, h2, w2 = x2.shape
    assert (n, h, w) == (n2, h2, w2), "x1/x2 must share batch and spatial dims"
    cout = weight.shape[0]
    out_dtype = x1.dtype
    hw = h * w

    # Free reshapes: HW is already contiguous in NCHW, no relayout.
    x1_r = x1.reshape(n, c1, hw)
    x2_r = x2.reshape(n, c2, hw)

    # Lane-aligned tile over H*W (multiple of 128), as large as useful.
    tile_hw = max(128, min(int(tile_hw), _round_up(hw, 128)))
    tile_hw = _round_up(tile_hw, 128)
    hw_pad = _round_up(hw, tile_hw)
    if hw_pad != hw:
        pad = ((0, 0), (0, 0), (0, hw_pad - hw))
        x1_r = jnp.pad(x1_r, pad)
        x2_r = jnp.pad(x2_r, pad)

    # Split the conv weight by input-channel group -> concat happens in-kernel.
    w1 = weight[:, :c1]            # (Cout, C1)
    w2 = weight[:, c1:]            # (Cout, C2)
    b2d = bias.reshape(cout, 1)    # (Cout, 1) broadcasts over the lane axis

    if compute_dtype is not None:  # e.g. jnp.bfloat16 on v6e/v7x
        x1_r = x1_r.astype(compute_dtype)
        x2_r = x2_r.astype(compute_dtype)
        w1 = w1.astype(compute_dtype)
        w2 = w2.astype(compute_dtype)
        b2d = b2d.astype(compute_dtype)

    # Explicit VMEM budget only if the estimated need exceeds conservative
    # defaults (keeps v7x's 64 MiB physical VMEM safe for big channel counts).
    itemsize = jnp.dtype(x1_r.dtype).itemsize
    blk_bytes = (c1 + c2) * tile_hw * itemsize + cout * tile_hw * jnp.dtype(out_dtype).itemsize
    wgt_bytes = (c1 + c2 + 1) * cout * itemsize
    est = 2 * blk_bytes + wgt_bytes          # double-buffered blocks + resident weights
    vmem_limit = None
    if est > (12 << 20):
        vmem_limit = min(int(1.5 * est), 48 << 20)

    grid = (n, hw_pad // tile_hw)
    out = pl.pallas_call(
        _fusion_kernel,
        out_shape=jax.ShapeDtypeStruct((n, cout, hw_pad), out_dtype),
        grid_spec=pltpu.PrefetchScalarGridSpec(
            num_scalar_prefetch=0,
            grid=grid,
            in_specs=[
                # batch dim squeezed out; channels on sublanes, HW tile on lanes
                pl.BlockSpec((None, c1, tile_hw), lambda b, j: (b, 0, j)),
                pl.BlockSpec((None, c2, tile_hw), lambda b, j: (b, 0, j)),
                # weights / bias: full arrays, resident across the grid
                pl.BlockSpec((cout, c1), lambda b, j: (0, 0)),
                pl.BlockSpec((cout, c2), lambda b, j: (0, 0)),
                pl.BlockSpec((cout, 1), lambda b, j: (0, 0)),
            ],
            out_specs=pl.BlockSpec((None, cout, tile_hw), lambda b, j: (b, 0, j)),
        ),
        compiler_params=pltpu.CompilerParams(
            dimension_semantics=("parallel", "parallel"),
            vmem_limit_bytes=vmem_limit),
    )(x1_r, x2_r, w1, w2, b2d)

    if hw_pad != hw:
        out = out[:, :, :hw]
    return out.reshape(n, cout, h, w)


if __name__ == "__main__":
    key = jax.random.PRNGKey(0)
    k1, k2, kw, kb = jax.random.split(key, 4)

    N, C1, C2, H, W = 2, 4, 4, 16, 16
    x1 = jax.random.normal(k1, (N, C1, H, W), dtype=jnp.float32)
    x2 = jax.random.normal(k2, (N, C2, H, W), dtype=jnp.float32)

    # Deterministic synthetic parameters for Conv2d(C1+C2, C1, kernel_size=1)
    cin = C1 + C2
    cout = C1
    bound = 1.0 / jnp.sqrt(cin)
    weight = jax.random.uniform(kw, (cout, cin), jnp.float32, -bound, bound)
    bias = jax.random.uniform(kb, (cout,), jnp.float32, -bound, bound)

    out = feature_fusion(x1, x2, weight, bias)
    out = jax.block_until_ready(out)

    # Pure-JAX reference (concat + 1x1 conv as einsum)
    h_cat = jnp.concatenate([x1, x2], axis=1)                 # (N, Cin, H, W)
    ref = jnp.einsum("ncHW,oc->noHW", h_cat, weight) + bias[None, :, None, None]
    assert out.shape == (N, cout, H, W)
    assert jnp.allclose(out, ref, atol=1e-5, rtol=1e-5)

    print("KERNEL_OK")
</pallas_src>

<mosaic_0001>
module attributes {stable_mosaic.version = 11 : i64} {
  func.func @_fusion_kernel(%arg0: i32, %arg1: i32, %arg2: memref<1x4x256xf32, #tpu.memory_space<vmem>>, %arg3: memref<1x4x256xf32, #tpu.memory_space<vmem>>, %arg4: memref<4x4xf32, #tpu.memory_space<vmem>>, %arg5: memref<4x4xf32, #tpu.memory_space<vmem>>, %arg6: memref<4x1xf32, #tpu.memory_space<vmem>>, %arg7: memref<1x4x256xf32, #tpu.memory_space<vmem>>) attributes {dimension_semantics = [#tpu.dimension_semantics<parallel>, #tpu.dimension_semantics<parallel>], iteration_bounds = array<i64: 2, 1>, scalar_prefetch = 0 : i64, scratch_operands = 0 : i64, tpu.core_type = #tpu.core_type<tc>, window_params = [{transform_indices = @transform_0, window_bounds = array<i64: 1, 4, 256>}, {transform_indices = @transform_1, window_bounds = array<i64: 1, 4, 256>}, {pipeline_mode = #tpu.pipeline_mode<synchronous>, transform_indices = @transform_2, window_bounds = array<i64: 4, 4>}, {pipeline_mode = #tpu.pipeline_mode<synchronous>, transform_indices = @transform_3, window_bounds = array<i64: 4, 4>}, {pipeline_mode = #tpu.pipeline_mode<synchronous>, transform_indices = @transform_4, window_bounds = array<i64: 4, 1>}, {transform_indices = @transform_5, window_bounds = array<i64: 1, 4, 256>}]} {
    %c0 = arith.constant 0 : index
    %c0_0 = arith.constant 0 : index
    %0 = vector.load %arg4[%c0, %c0_0] : memref<4x4xf32, #tpu.memory_space<vmem>>, vector<4x4xf32>
    %c0_1 = arith.constant 0 : index
    %c0_2 = arith.constant 0 : index
    %c0_3 = arith.constant 0 : index
    %1 = vector.load %arg2[%c0_1, %c0_2, %c0_3] : memref<1x4x256xf32, #tpu.memory_space<vmem>>, vector<1x4x256xf32>
    %2 = vector.shape_cast %1 : vector<1x4x256xf32> to vector<4x256xf32>
    %cst = arith.constant dense<0.000000e+00> : vector<4x256xf32>
    %3 = tpu.matmul %0, %2, %cst {dimension_numbers = #tpu.dot_dimension_numbers<[1], [0], [0], [1], [0, 0, 1, 1], [], []>} : vector<4x4xf32>, vector<4x256xf32>, vector<4x256xf32> -> vector<4x256xf32>
    %c0_4 = arith.constant 0 : index
    %c0_5 = arith.constant 0 : index
    %4 = vector.load %arg5[%c0_4, %c0_5] : memref<4x4xf32, #tpu.memory_space<vmem>>, vector<4x4xf32>
    %c0_6 = arith.constant 0 : index
    %c0_7 = arith.constant 0 : index
    %c0_8 = arith.constant 0 : index
    %5 = vector.load %arg3[%c0_6, %c0_7, %c0_8] : memref<1x4x256xf32, #tpu.memory_space<vmem>>, vector<1x4x256xf32>
    %6 = vector.shape_cast %5 : vector<1x4x256xf32> to vector<4x256xf32>
    %cst_9 = arith.constant dense<0.000000e+00> : vector<4x256xf32>
    %7 = tpu.matmul %4, %6, %cst_9 {dimension_numbers = #tpu.dot_dimension_numbers<[1], [0], [0], [1], [0, 0, 1, 1], [], []>} : vector<4x4xf32>, vector<4x256xf32>, vector<4x256xf32> -> vector<4x256xf32>
    %8 = arith.addf %3, %7 : vector<4x256xf32>
    %c0_10 = arith.constant 0 : index
    %c0_11 = arith.constant 0 : index
    %9 = vector.load %arg6[%c0_10, %c0_11] : memref<4x1xf32, #tpu.memory_space<vmem>>, vector<4x1xf32>
    %10 = vector.broadcast %9 : vector<4x1xf32> to vector<4x256xf32>
    %11 = arith.addf %8, %10 : vector<4x256xf32>
    %c0_12 = arith.constant 0 : index
    %c0_13 = arith.constant 0 : index
    %c0_14 = arith.constant 0 : index
    %12 = vector.load %arg7[%c0_12, %c0_13, %c0_14] : memref<1x4x256xf32, #tpu.memory_space<vmem>>, vector<1x4x256xf32>
    %13 = vector.shape_cast %12 : vector<1x4x256xf32> to vector<4x256xf32>
    %14 = vector.shape_cast %11 : vector<4x256xf32> to vector<1x4x256xf32>
    tpu.vector_store %arg7[%c0_12, %c0_13, %c0_14], %14 {strides = array<i32>} : memref<1x4x256xf32, #tpu.memory_space<vmem>>, vector<1x4x256xf32>,
    return
  }
  func.func @transform_0(%arg0: i32, %arg1: i32) -> (i32, i32, i32) {
    %c0_i32 = arith.constant 0 : i32
    %c0_i32_0 = arith.constant 0 : i32
    return %arg0, %c0_i32, %arg1 : i32, i32, i32
  }
  func.func @transform_1(%arg0: i32, %arg1: i32) -> (i32, i32, i32) {
    %c0_i32 = arith.constant 0 : i32
    %c0_i32_0 = arith.constant 0 : i32
    return %arg0, %c0_i32, %arg1 : i32, i32, i32
  }
  func.func @transform_2(%arg0: i32, %arg1: i32) -> (i32, i32) {
    %c0_i32 = arith.constant 0 : i32
    %c0_i32_0 = arith.constant 0 : i32
    %c0_i32_1 = arith.constant 0 : i32
    return %c0_i32, %c0_i32_0 : i32, i32
  }
  func.func @transform_3(%arg0: i32, %arg1: i32) -> (i32, i32) {
    %c0_i32 = arith.constant 0 : i32
    %c0_i32_0 = arith.constant 0 : i32
    %c0_i32_1 = arith.constant 0 : i32
    return %c0_i32, %c0_i32_0 : i32, i32
  }
  func.func @transform_4(%arg0: i32, %arg1: i32) -> (i32, i32) {
    %c0_i32 = arith.constant 0 : i32
    %c0_i32_0 = arith.constant 0 : i32
    %c0_i32_1 = arith.constant 0 : i32
    return %c0_i32, %c0_i32_0 : i32, i32
  }
  func.func @transform_5(%arg0: i32, %arg1: i32) -> (i32, i32, i32) {
    %c0_i32 = arith.constant 0 : i32
    %c0_i32_0 = arith.constant 0 : i32
    return %arg0, %c0_i32, %arg1 : i32, i32, i32
  }
}

</mosaic_0001>

<llo_original>
// kernel: tpu_custom_call.1
$region0: #{tpu_custom_call.1}
  #allocation0 [shape = 'u32[]', space=smem, size = 0x4, offset = 0x4, fixed_abs, tag = 'smem constant byte address 0x4 - core index']
  #allocation1 [shape = 'u32[72,128]{1,0:T(1,128)}', space=vmem, size = 0x9000, scoped, tag = 'internal scratch']
  %s0 = inlined_call_operand.hbm [shape: f32[2,4,256], index: 0, kind: input, shape index: {}]
  %s1 = inlined_call_operand.hbm [shape: f32[2,4,256], index: 1, kind: input, shape index: {}]
  %s2 = inlined_call_operand.vmem [shape: f32[4,4], index: 2, kind: input, shape index: {}]
  %s3 = inlined_call_operand.hbm [shape: f32[4,4], index: 3, kind: input, shape index: {}]
  %s4 = inlined_call_operand.vmem [shape: f32[4,1], index: 4, kind: input, shape index: {}]
  %s5 = inlined_call_operand.hbm [shape: f32[2,4,256], index: 5, kind: output, shape index: {}]
  %s6 = sld [smem:[#allocation0]]
  $region65: #{tpu_custom_call.1} parent=0
    _
  %s8 = ssub.s32 1, %s6
  %s9 = scalar_select 0, %s8, %s6
  $region1: #{tpu_custom_call.1} parent=0
    #allocation2 [shape = 'u8[8192]{0}', space=vmem, size = 0x2000, scoped, tag = 'input window, operand 0']
    #allocation3 [shape = 's32[2]{0}', space=sflag, size = 0x8, scoped, tag = 'scoped memory for tpu_custom_call.1']
    #allocation4 [shape = 's32[2]{0}', space=sflag, size = 0x8, scoped, tag = 'scoped memory for tpu_custom_call.1']
    #allocation5 [shape = 'u8[8192]{0}', space=vmem, size = 0x2000, scoped, tag = 'input window, operand 1']
    #allocation6 [shape = 's32[2]{0}', space=sflag, size = 0x8, scoped, tag = 'scoped memory for tpu_custom_call.1']
    #allocation7 [shape = 'u8[2048]{0}', space=vmem, size = 0x800, scoped, tag = 'input window, operand 3, single buffered']
    #allocation8 [shape = 'u8[8192]{0}', space=vmem, size = 0x2000, scoped, tag = 'output window, operand 0']
    %10 = vsyncpa [#allocation3], 0
    %s11 = scalar_lea.sflag [#allocation3], 1
    %12 = vsyncpa %s11, 0
    %13 = vsyncpa [#allocation6], 0
    %s14 = scalar_lea.sflag [#allocation6], 1
    %15 = vsyncpa %s14, 0
    %16 = vsyncpa [#allocation4], 0
    %s17 = scalar_lea.sflag [#allocation4], 1
    %18 = vsyncpa %s17, 0
    loop: start=0, step=1, limit=4
    $region2: #{tpu_custom_call.1} parent=1 // loop_pre_header
      _
    $region3: #{tpu_custom_call.1} parent=1 // loop_header
      %s20 = sphi 0, %s24
      %p21 = scmp.ge.s32.totalorder %s20, 4
      %s27 = sphi 0, %s39
      %s28 = sphi 0, %s35
      %s29 = sphi 0, %s27
      %s30 = sphi 0, %s28
      %s31 = sphi 0, %s29
      %s32 = sphi 0, %s30
      %s44 = sphi 0, %s46
      %s47 = sphi 0, %s44
      %s48 = sphi 0, %s47
      %s64 = sphi 0, %s48
      %s72 = sphi 0, %s74
      %s75 = sphi 0, %s72
      %s76 = sphi 0, %s75
      %s92 = sphi 0, %s76
      %s96 = sphi 0, %s96
      %s98 = sphi 0, %s96
      %s99 = sphi 0, %s98
      %s113 = sphi 0, %s99
      %s117 = sphi 0, %s117
      %s119 = sphi 0, %s117
      %s120 = sphi 0, %s119
      %s134 = sphi 0, %s120
      %s138 = sphi 0, %s138
      %s140 = sphi 0, %s138
      %s141 = sphi 0, %s140
      %s155 = sphi 0, %s141
      %s163 = sphi 0, %s165
      %s166 = sphi 0, %s163
      %s167 = sphi 0, %s166
      %s183 = sphi 0, %s167
    $region4: #{tpu_custom_call.1} parent=1 // loop_header_branch
      %23 = sbr.rel (%p21) target = $region8
    $region5: #{tpu_custom_call.1} parent=1 // loop_body
      %s25 = ssub.s32 %s20, 1
      %s26 = ssub.s32 %s20, 2
      %s33 = sadd.s32 1, %s28
      %p34 = scmp.ge.s32.totalorder %s33, 1
      %s35 = scalar_select %p34, 0, %s33
      %s36 = sadd.s32 1, %s27
      %s37 = scalar_select %p34, %s36, %s27
      %p38 = scmp.ge.s32.totalorder %s37, 2
      %s39 = scalar_select %p38, 0, %s37
      %s40 = ssub.s32 %s27, %s39
      %s41 = ssub.s32 %s28, %s35
      %s42 = sor.u32 %s40, %s41
      %p43 = scmp.eq.s32.totalorder %s42, 0
      %s45 = sadd.s32 %s44, 1
      %s46 = scalar_select %p43, %s44, %s45
      %p49 = pneg %p43
      %p50 = scmp.eq.s32.totalorder %s20, 1
      %p51 = por %p49, %p50
      %p52 = scmp.ne.s32.totalorder %s44, %s47
      %p53 = scmp.eq.s32.totalorder %s20, 0
      %p54 = por %p52, %p53
      %p55 = scmp.ne.s32.totalorder %s44, %s47
      %p56 = scmp.eq.s32.totalorder %s25, 1
      %p57 = por %p55, %p56
      %p58 = scmp.ne.s32.totalorder %s47, %s48
      %p59 = scmp.eq.s32.totalorder %s25, 0
      %p60 = por %p58, %p59
      %p61 = scmp.ne.s32.totalorder %s47, %s48
      %p62 = scmp.eq.s32.totalorder %s26, 1
      %p63 = por %p61, %p62
      %p65 = scmp.ne.s32.totalorder %s48, %s64
      %p66 = scmp.eq.s32.totalorder %s26, 0
      %p67 = por %p65, %p66
      %s68 = ssub.s32 %s27, %s39
      %s69 = ssub.s32 %s28, %s35
      %s70 = sor.u32 %s68, %s69
      %p71 = scmp.eq.s32.totalorder %s70, 0
      %s73 = sadd.s32 %s72, 1
      %s74 = scalar_select %p71, %s72, %s73
      %p77 = pneg %p71
      %p78 = scmp.eq.s32.totalorder %s20, 1
      %p79 = por %p77, %p78
      %p80 = scmp.ne.s32.totalorder %s72, %s75
      %p81 = scmp.eq.s32.totalorder %s20, 0
      %p82 = por %p80, %p81
      %p83 = scmp.ne.s32.totalorder %s72, %s75
      %p84 = scmp.eq.s32.totalorder %s25, 1
      %p85 = por %p83, %p84
      %p86 = scmp.ne.s32.totalorder %s75, %s76
      %p87 = scmp.eq.s32.totalorder %s25, 0
      %p88 = por %p86, %p87
      %p89 = scmp.ne.s32.totalorder %s75, %s76
      %p90 = scmp.eq.s32.totalorder %s26, 1
      %p91 = por %p89, %p90
      %p93 = scmp.ne.s32.totalorder %s76, %s92
      %p94 = scmp.eq.s32.totalorder %s26, 0
      %p95 = por %p93, %p94
      %s97 = sadd.s32 %s96, 1
      %p100 = scmp.eq.s32.totalorder %s20, 1
      %p101 = scmp.ne.s32.totalorder %s96, %s98
      %p102 = scmp.eq.s32.totalorder %s20, 0
      %p103 = por %p101, %p102
      %p104 = scmp.ne.s32.totalorder %s96, %s98
      %p105 = scmp.eq.s32.totalorder %s25, 1
      %p106 = por %p104, %p105
      %p107 = scmp.ne.s32.totalorder %s98, %s99
      %p108 = scmp.eq.s32.totalorder %s25, 0
      %p109 = por %p107, %p108
      %p110 = scmp.ne.s32.totalorder %s98, %s99
      %p111 = scmp.eq.s32.totalorder %s26, 1
      %p112 = por %p110, %p111
      %p114 = scmp.ne.s32.totalorder %s99, %s113
      %p115 = scmp.eq.s32.totalorder %s26, 0
      %p116 = por %p114, %p115
      %s118 = sadd.s32 %s117, 1
      %p121 = scmp.eq.s32.totalorder %s20, 1
      %p122 = scmp.ne.s32.totalorder %s117, %s119
      %p123 = scmp.eq.s32.totalorder %s20, 0
      %p124 = por %p122, %p123
      %p125 = scmp.ne.s32.totalorder %s117, %s119
      %p126 = scmp.eq.s32.totalorder %s25, 1
      %p127 = por %p125, %p126
      %p128 = scmp.ne.s32.totalorder %s119, %s120
      %p129 = scmp.eq.s32.totalorder %s25, 0
      %p130 = por %p128, %p129
      %p131 = scmp.ne.s32.totalorder %s119, %s120
      %p132 = scmp.eq.s32.totalorder %s26, 1
      %p133 = por %p131, %p132
      %p135 = scmp.ne.s32.totalorder %s120, %s134
      %p136 = scmp.eq.s32.totalorder %s26, 0
      %p137 = por %p135, %p136
      %s139 = sadd.s32 %s138, 1
      %p142 = scmp.eq.s32.totalorder %s20, 1
      %p143 = scmp.ne.s32.totalorder %s138, %s140
      %p144 = scmp.eq.s32.totalorder %s20, 0
      %p145 = por %p143, %p144
      %p146 = scmp.ne.s32.totalorder %s138, %s140
      %p147 = scmp.eq.s32.totalorder %s25, 1
      %p148 = por %p146, %p147
      %p149 = scmp.ne.s32.totalorder %s140, %s141
      %p150 = scmp.eq.s32.totalorder %s25, 0
      %p151 = por %p149, %p150
      %p152 = scmp.ne.s32.totalorder %s140, %s141
      %p153 = scmp.eq.s32.totalorder %s26, 1
      %p154 = por %p152, %p153
      %p156 = scmp.ne.s32.totalorder %s141, %s155
      %p157 = scmp.eq.s32.totalorder %s26, 0
      %p158 = por %p156, %p157
      %s159 = ssub.s32 %s27, %s39
      %s160 = ssub.s32 %s28, %s35
      %s161 = sor.u32 %s159, %s160
      %p162 = scmp.eq.s32.totalorder %s161, 0
      %s164 = sadd.s32 %s163, 1
      %s165 = scalar_select %p162, %s163, %s164
      %p168 = pneg %p162
      %p169 = scmp.eq.s32.totalorder %s20, 1
      %p170 = por %p168, %p169
      %p171 = scmp.ne.s32.totalorder %s163, %s166
      %p172 = scmp.eq.s32.totalorder %s20, 0
      %p173 = por %p171, %p172
      %p174 = scmp.ne.s32.totalorder %s163, %s166
      %p175 = scmp.eq.s32.totalorder %s25, 1
      %p176 = por %p174, %p175
      %p177 = scmp.ne.s32.totalorder %s166, %s167
      %p178 = scmp.eq.s32.totalorder %s25, 0
      %p179 = por %p177, %p178
      %p180 = scmp.ne.s32.totalorder %s166, %s167
      %p181 = scmp.eq.s32.totalorder %s26, 1
      %p182 = por %p180, %p181
      %p184 = scmp.ne.s32.totalorder %s167, %s183
      %p185 = scmp.eq.s32.totalorder %s26, 0
      %p186 = por %p184, %p185
      %p187 = scmp.le.s32.totalorder 1, %s20
      %p188 = scmp.lt.s32.totalorder %s20, 3
      %p189 = pnand %p187, %p188
      %p190 = pneg %p189
      // Predicated region
      $region9: #{tpu_custom_call.1} parent=5 // pred_check
        _
      $region10: #{tpu_custom_call.1} parent=5 // pred_check_branch
        %192 = sbr.rel (%p189) target = $region12
      $region11: #{tpu_custom_call.1} parent=5 // pred_region
        %s193 = ssub.s32 %s20, 1
        // Predicated region
        $region13: #{tpu_custom_call.1} parent=11 // pred_check
          %p194 = pneg %p109
        $region14: #{tpu_custom_call.1} parent=11 // pred_check_branch
          %196 = sbr.rel (%p194) target = $region16
        $region15: #{tpu_custom_call.1} parent=11 // pred_region
          _
        $region16: #{tpu_custom_call.1} parent=11 // pred_fallthru
          _
        // Predicated region
        $region17: #{tpu_custom_call.1} parent=11 // pred_check
          %p197 = pneg %p130
        $region18: #{tpu_custom_call.1} parent=11 // pred_check_branch
          %199 = sbr.rel (%p197) target = $region20
        $region19: #{tpu_custom_call.1} parent=11 // pred_region
          %201 = vsyncadd [#allocation6], 0
          %s203 = sshll.u32 %s3, 4
          %s204 = int_to_ptr.hbm [resolvable:$true] %s203
          %s205 = sshll.u32 [#allocation7], 4
          %s206 = int_to_ptr.vmem [resolvable:$true] %s205
          %208 = dma.hbm_to_vmem [thread:$0]  %s204, 64, %s206, [#allocation6]
        $region20: #{tpu_custom_call.1} parent=11 // pred_fallthru
          _
        // Predicated region
        $region21: #{tpu_custom_call.1} parent=11 // pred_check
          %p209 = pneg %p151
        $region22: #{tpu_custom_call.1} parent=11 // pred_check_branch
          %211 = sbr.rel (%p209) target = $region24
        $region23: #{tpu_custom_call.1} parent=11 // pred_region
          _
        $region24: #{tpu_custom_call.1} parent=11 // pred_fallthru
          _
      $region12: #{tpu_custom_call.1} parent=5 // pred_fallthru
        _
      %p212 = scmp.lt.s32.totalorder %s20, 2
      // Predicated region
      $region25: #{tpu_custom_call.1} parent=5 // pred_check
        %p213 = pneg %p212
      $region26: #{tpu_custom_call.1} parent=5 // pred_check_branch
        %215 = sbr.rel (%p213) target = $region28
      $region27: #{tpu_custom_call.1} parent=5 // pred_region
        // Predicated region
        $region29: #{tpu_custom_call.1} parent=27 // pred_check
          %p216 = pneg %p54
        $region30: #{tpu_custom_call.1} parent=27 // pred_check_branch
          %218 = sbr.rel (%p216) target = $region32
        $region31: #{tpu_custom_call.1} parent=27 // pred_region
          %s219 = sand.u32 %s44, 1
          %s220 = scalar_lea.sflag [#allocation3], %s219
          %s221 = sand.u32 %s44, 1
          %s222 = smul.addr %s221, 8
          %s223 = scalar_lea.vmem [#allocation2], %s222
          %s224 = smul.u32 2, %s28
          %226 = vsyncadd %s220, 0
          %s227 = smul.addr %s27, 2
          %s228 = sadd.s32 %s224, %s227
          %s229 = smul.addr %s228, 4
          %s230 = scalar_lea.hbm %s0, %s229
          %s232 = sshll.u32 %s230, 4
          %s233 = int_to_ptr.hbm [resolvable:$true] %s232
          %s234 = sshll.u32 %s223, 4
          %s235 = int_to_ptr.vmem [resolvable:$true] %s234
          %237 = dma.hbm_to_vmem [thread:$0]  %s233, 128, %s235, %s220
        $region32: #{tpu_custom_call.1} parent=27 // pred_fallthru
          _
        // Predicated region
        $region33: #{tpu_custom_call.1} parent=27 // pred_check
          %p238 = pneg %p82
        $region34: #{tpu_custom_call.1} parent=27 // pred_check_branch
          %240 = sbr.rel (%p238) target = $region36
        $region35: #{tpu_custom_call.1} parent=27 // pred_region
          %s241 = sand.u32 %s20, 1
          %s242 = scalar_lea.sflag [#allocation6], %s241
          %s243 = sand.u32 %s72, 1
          %s244 = smul.addr %s243, 8
          %s245 = scalar_lea.vmem [#allocation5], %s244
          %s246 = smul.u32 2, %s28
          %248 = vsyncadd %s242, 0
          %s249 = smul.addr %s27, 2
          %s250 = sadd.s32 %s246, %s249
          %s251 = smul.addr %s250, 4
          %s252 = scalar_lea.hbm %s1, %s251
          %s254 = sshll.u32 %s252, 4
          %s255 = int_to_ptr.hbm [resolvable:$true] %s254
          %s256 = sshll.u32 %s245, 4
          %s257 = int_to_ptr.vmem [resolvable:$true] %s256
          %259 = dma.hbm_to_vmem [thread:$0]  %s255, 128, %s257, %s242
        $region36: #{tpu_custom_call.1} parent=27 // pred_fallthru
          _
      $region28: #{tpu_custom_call.1} parent=5 // pred_fallthru
        _
      %p260 = scmp.le.s32.totalorder 1, %s20
      %p261 = scmp.lt.s32.totalorder %s20, 3
      %p262 = pnand %p260, %p261
      %p263 = pneg %p262
      // Predicated region
      $region37: #{tpu_custom_call.1} parent=5 // pred_check
        _
      $region38: #{tpu_custom_call.1} parent=5 // pred_check_branch
        %265 = sbr.rel (%p262) target = $region40
      $region39: #{tpu_custom_call.1} parent=5 // pred_region
        %s266 = ssub.s32 %s20, 1
        %s267 = sand.u32 %s47, 1
        %s268 = scalar_lea.sflag [#allocation3], %s267
        %s269 = sand.u32 %s47, 1
        %s270 = smul.addr %s269, 8
        %s271 = scalar_lea.vmem [#allocation2], %s270
        // Predicated region
        $region41: #{tpu_custom_call.1} parent=39 // pred_check
          %p272 = pneg %p60
        $region42: #{tpu_custom_call.1} parent=39 // pred_check_branch
          %274 = sbr.rel (%p272) target = $region44
        $region43: #{tpu_custom_call.1} parent=39 // pred_region
          %276 = dma.done %s268, 128
        $region44: #{tpu_custom_call.1} parent=39 // pred_fallthru
          _
        %s277 = sand.u32 %s25, 1
        %s278 = scalar_lea.sflag [#allocation6], %s277
        %s279 = sand.u32 %s75, 1
        %s280 = smul.addr %s279, 8
        %s281 = scalar_lea.vmem [#allocation5], %s280
        // Predicated region
        $region45: #{tpu_custom_call.1} parent=39 // pred_check
          %p282 = pneg %p88
        $region46: #{tpu_custom_call.1} parent=39 // pred_check_branch
          %284 = sbr.rel (%p282) target = $region48
        $region47: #{tpu_custom_call.1} parent=39 // pred_region
          %286 = dma.done %s278, 128
        $region48: #{tpu_custom_call.1} parent=39 // pred_fallthru
          _
        // Predicated region
        $region49: #{tpu_custom_call.1} parent=39 // pred_check
          %p287 = pneg %p130
        $region50: #{tpu_custom_call.1} parent=39 // pred_check_branch
          %289 = sbr.rel (%p287) target = $region52
        $region51: #{tpu_custom_call.1} parent=39 // pred_region
          %291 = dma.done [#allocation6], 64
        $region52: #{tpu_custom_call.1} parent=39 // pred_fallthru
          _
        %s292 = sand.u32 %s47, 1
        %s293 = scalar_lea.sflag [#allocation3], %s292
        %s294 = sand.u32 %s47, 1
        %s295 = smul.addr %s294, 8
        %s296 = scalar_lea.vmem [#allocation2], %s295
        %p297 = pneg %p60
        %p298 = pneg %p57
        %s299 = sand.u32 %s25, 1
        %s300 = scalar_lea.sflag [#allocation6], %s299
        %s301 = sand.u32 %s75, 1
        %s302 = smul.addr %s301, 8
        %s303 = scalar_lea.vmem [#allocation5], %s302
        %p304 = pneg %p88
        %p305 = pneg %p85
        %p306 = pneg %p109
        %p307 = pneg %p106
        %p308 = pneg %p130
        %p309 = pneg %p127
        %p310 = pneg %p151
        %p311 = pneg %p148
        %p312 = pneg %p179
        %p313 = pneg %p176
        %s314 = sand.u32 %s166, 1
        %s315 = scalar_lea.sflag [#allocation4], %s314
        %s316 = sand.u32 %s166, 1
        %s317 = smul.addr %s316, 8
        %s318 = scalar_lea.vmem [#allocation8], %s317
        %s319 = smul.u32 2, %s30
        %s320 = smul.u32 2, %s30
        %s321 = smul.u32 2, %s30
        %v322 = vld [vmem:[%s2] sm:$0xf]
        %v323 = vld [vmem:[%s271] sm:$0xff]
        %v324 = vld [vmem:[#allocation7] sm:$0xf]
        %v325 = vld [vmem:[%s281] sm:$0xff]
        %327 = vst [vmem:[#allocation1] ss:$2 sm:$0xff] %v325
        %v328 = vld.sshfl [vmem:[#allocation1] sm:$0xff pattern:$0x75316420]
        %v329 = vld.sshfl [vmem:[#allocation1 + $0x8] sm:$0xff pattern:$0x75316420]
        %vm330 = vcmask 31744
        %v332 = vsel %vm330, %v324, 0
        %vm334 = vcmask 1043456
        %v335 = vsel %vm334, %v328, 0
        %v337 = vsel %vm334, %v329, 0
        %339 = vmatpush.msra.mxu0 0.0
        %340 = vmatpush.msra.mxu0 0.0
        %341 = vmatpush.msra.mxu0 0.0
        %342 = vmatpush.msra.mxu0 0.0
        %343 = vmatpush.msra.mxu0 0.0
        %344 = vmatpush.msra.mxu0 0.0
        %345 = vmatpush.msra.mxu0 0.0
        %346 = vmatpush.msra.mxu0 0.0
        %347 = vmatpush.msra.mxu0 0.0
        %348 = vmatpush.msra.mxu0 0.0
        %349 = vmatpush.msra.mxu0 0.0
        %350 = vmatpush.msra.mxu0 0.0
        %351 = vmatpush.msra.mxu0 0.0
        %352 = vmatpush.msra.mxu0 0.0
        %353 = vmatpush.msra.mxu0 0.0
        %354 = vmatpush.msra.mxu0 %v335
        %355 = vmatmul.f32.gmra.mxu0 %v332
        %v356 = vpop.f32.mrf.mxu0
        %v357 = vadd.f32 0.0, %v356
        %358 = vdwg.mxu0
        %359 = vmatpush.msra.mxu0 0.0
        %360 = vmatpush.msra.mxu0 0.0
        %361 = vmatpush.msra.mxu0 0.0
        %362 = vmatpush.msra.mxu0 0.0
        %363 = vmatpush.msra.mxu0 0.0
        %364 = vmatpush.msra.mxu0 0.0
        %365 = vmatpush.msra.mxu0 0.0
        %366 = vmatpush.msra.mxu0 0.0
        %367 = vmatpush.msra.mxu0 0.0
        %368 = vmatpush.msra.mxu0 0.0
        %369 = vmatpush.msra.mxu0 0.0
        %370 = vmatpush.msra.mxu0 0.0
        %371 = vmatpush.msra.mxu0 0.0
        %372 = vmatpush.msra.mxu0 0.0
        %373 = vmatpush.msra.mxu0 0.0
        %374 = vmatpush.msra.mxu0 %v337
        %375 = vmatmul.f32.gmra.mxu0 %v332
        %v376 = vpop.f32.mrf.mxu0
        %v377 = vadd.f32 0.0, %v376
        %378 = vdwg.mxu0
        %380 = vst [vmem:[#allocation1] ss:$2 sm:$0xff] %v323
        %v381 = vld.sshfl [vmem:[#allocation1] sm:$0xff pattern:$0x75316420]
        %v382 = vld.sshfl [vmem:[#allocation1 + $0x8] sm:$0xff pattern:$0x75316420]
        %v384 = vsel %vm330, %v322, 0
        %v386 = vsel %vm334, %v381, 0
        %v388 = vsel %vm334, %v382, 0
        %390 = vmatpush.msra.mxu0 0.0
        %391 = vmatpush.msra.mxu0 0.0
        %392 = vmatpush.msra.mxu0 0.0
        %393 = vmatpush.msra.mxu0 0.0
        %394 = vmatpush.msra.mxu0 0.0
        %395 = vmatpush.msra.mxu0 0.0
        %396 = vmatpush.msra.mxu0 0.0
        %397 = vmatpush.msra.mxu0 0.0
        %398 = vmatpush.msra.mxu0 0.0
        %399 = vmatpush.msra.mxu0 0.0
        %400 = vmatpush.msra.mxu0 0.0
        %401 = vmatpush.msra.mxu0 0.0
        %402 = vmatpush.msra.mxu0 0.0
        %403 = vmatpush.msra.mxu0 0.0
        %404 = vmatpush.msra.mxu0 0.0
        %405 = vmatpush.msra.mxu0 %v386
        %406 = vmatmul.f32.gmra.mxu0 %v384
        %v407 = vpop.f32.mrf.mxu0
        %v408 = vadd.f32 %v357, %v407
        %409 = vdwg.mxu0
        %410 = vmatpush.msra.mxu0 0.0
        %411 = vmatpush.msra.mxu0 0.0
        %412 = vmatpush.msra.mxu0 0.0
        %413 = vmatpush.msra.mxu0 0.0
        %414 = vmatpush.msra.mxu0 0.0
        %415 = vmatpush.msra.mxu0 0.0
        %416 = vmatpush.msra.mxu0 0.0
        %417 = vmatpush.msra.mxu0 0.0
        %418 = vmatpush.msra.mxu0 0.0
        %419 = vmatpush.msra.mxu0 0.0
        %420 = vmatpush.msra.mxu0 0.0
        %421 = vmatpush.msra.mxu0 0.0
        %422 = vmatpush.msra.mxu0 0.0
        %423 = vmatpush.msra.mxu0 0.0
        %424 = vmatpush.msra.mxu0 0.0
        %425 = vmatpush.msra.mxu0 %v388
        %426 = vmatmul.f32.gmra.mxu0 %v384
        %v427 = vpop.f32.mrf.mxu0
        %v428 = vadd.f32 %v377, %v427
        %429 = vdwg.mxu0
        %v430 = vld [vmem:[%s4] sm:$0xf]
        %432 = vset.pattern.permute.xlu0 0
        %433 = vperm.xlu0 %432, %v430
        %v434 = vpop.permute.xlu0 %433
        %v436 = vadd.f32 %v408, %v434
        %v437 = vadd.f32 %v428, %v434
        %v440 = vrot.slane %v437, 4
        %v441 = vsel %vm334, %v436, %v440
        %443 = vst [vmem:[%s318] sm:$0xff] %v441
        %s444 = sand.u32 %s166, 1
        %s445 = scalar_lea.sflag [#allocation4], %s444
        %s446 = sand.u32 %s166, 1
        %s447 = smul.addr %s446, 8
        %s448 = scalar_lea.vmem [#allocation8], %s447
        // Predicated region
        $region53: #{tpu_custom_call.1} parent=39 // pred_check
          %p449 = pneg %p176
        $region54: #{tpu_custom_call.1} parent=39 // pred_check_branch
          %451 = sbr.rel (%p449) target = $region56
        $region55: #{tpu_custom_call.1} parent=39 // pred_region
          %s452 = smul.u32 2, %s30
          %454 = vsyncadd %s445, 0
          %s455 = smul.addr %s29, 2
          %s456 = sadd.s32 %s452, %s455
          %s457 = smul.addr %s456, 4
          %s458 = scalar_lea.hbm %s5, %s457
          %s460 = sshll.u32 %s448, 4
          %s461 = int_to_ptr.vmem [resolvable:$true] %s460
          %s462 = sshll.u32 %s458, 4
          %s463 = int_to_ptr.hbm [resolvable:$true] %s462
          %465 = dma.vmem_to_hbm [thread:$0]  %s461, 128, %s463, %s445
        $region56: #{tpu_custom_call.1} parent=39 // pred_fallthru
          _
      $region40: #{tpu_custom_call.1} parent=5 // pred_fallthru
        _
      %p466 = scmp.le.s32.totalorder 2, %s20
      // Predicated region
      $region57: #{tpu_custom_call.1} parent=5 // pred_check
        %p467 = pneg %p466
      $region58: #{tpu_custom_call.1} parent=5 // pred_check_branch
        %469 = sbr.rel (%p467) target = $region60
      $region59: #{tpu_custom_call.1} parent=5 // pred_region
        %s470 = ssub.s32 %s20, 2
        // Predicated region
        $region61: #{tpu_custom_call.1} parent=59 // pred_check
          %p471 = pneg %p182
        $region62: #{tpu_custom_call.1} parent=59 // pred_check_branch
          %473 = sbr.rel (%p471) target = $region64
        $region63: #{tpu_custom_call.1} parent=59 // pred_region
          %s474 = sand.u32 %s167, 1
          %s475 = scalar_lea.sflag [#allocation4], %s474
          %s476 = sand.u32 %s167, 1
          %s477 = smul.addr %s476, 8
          %s478 = scalar_lea.vmem [#allocation8], %s477
          %480 = dma.done %s475, 128
        $region64: #{tpu_custom_call.1} parent=59 // pred_fallthru
          _
      $region60: #{tpu_custom_call.1} parent=5 // pred_fallthru
        _
    $region6: #{tpu_custom_call.1} parent=1 // loop_footer
      %s24 = sadd.s32 1, %s20
    $region7: #{tpu_custom_call.1} parent=1 // loop_footer_branch
      %19 = sbr.rel target = $region3
    $region8: #{tpu_custom_call.1} parent=1 // loop_exit
      _
    %481 = vsyncpa [#allocation3], 1
    %s482 = scalar_lea.sflag [#allocation3], 1
    %483 = vsyncpa %s482, 1
    %484 = vsyncpa [#allocation6], 1
    %s485 = scalar_lea.sflag [#allocation6], 1
    %486 = vsyncpa %s485, 1
    %487 = vsyncpa [#allocation4], 1
    %s488 = scalar_lea.sflag [#allocation4], 1
    %489 = vsyncpa %s488, 1

</llo_original>
